<compile_context>
chip_gen: v7x
topology: tpu7x:2x2x1
jax: 0.10.0
libtpu: 0.0.40
codegen_flags: <defaults>
</compile_context>

<pallas_src>
import jax
import jax.numpy as jnp
from jax.experimental import pallas as pl
from jax.experimental.pallas import tpu as pltpu


def _copy_kernel(t1_ref, o_ref):
    # forward(t1, t2) -> t1 : straight tile copy of t1.
    o_ref[...] = t1_ref[...]


def _as_2d_slab(x):
    """Flatten x into a 2D slab; lane-dense (last dim = 128) when it divides."""
    n = x.size
    if n >= 128 and n % 128 == 0:
        return x.reshape(n // 128, 128)
    # Full-array block (block_shape == array dims) satisfies the (8,128) rule
    # regardless of divisibility.
    return x.reshape(1, n)


def net2_forward(t1, t2=None):
    """Pallas equivalent of Net2.forward(t1, t2): returns t1 unchanged.

    t2 is accepted only to mirror the PyTorch call signature; it is never
    touched and never handed to pallas_call, so no DMA is generated for it.
    """
    del t2
    orig_shape = t1.shape
    slab = _as_2d_slab(t1)
    rows, lane = slab.shape
    elem_bytes = slab.dtype.itemsize

    # Small path: one block covering the whole slab (no grid-step overhead).
    # 2 MiB per buffer keeps in+out double-buffering < 8 MiB -> safe on v5e's
    # 16 MiB default scoped VMEM as well as v6e/v7x.
    small_limit_bytes = 2 * 1024 * 1024

    if rows * lane * elem_bytes <= small_limit_bytes:
        out = pl.pallas_call(
            _copy_kernel,
            out_shape=jax.ShapeDtypeStruct((rows, lane), slab.dtype),
            grid=(1,),
            in_specs=[pl.BlockSpec((rows, lane), lambda i: (0, 0))],
            out_specs=pl.BlockSpec((rows, lane), lambda i: (0, 0)),
            input_output_aliases={0: 0},
            compiler_params=pltpu.CompilerParams(
                dimension_semantics=("parallel",)),
        )(slab)
    else:
        # Large-input path: big row tiles near the HBM roofline.
        tile_rows = 1024  # 1024 x 128 x 4B = 512 KiB f32 per tile.
        row_pad = (-rows) % tile_rows
        padded = jnp.pad(slab, ((0, row_pad), (0, 0))) if row_pad else slab
        rows_p = rows + row_pad
        out = pl.pallas_call(
            _copy_kernel,
            out_shape=jax.ShapeDtypeStruct((rows_p, lane), slab.dtype),
            grid=(rows_p // tile_rows,),
            in_specs=[pl.BlockSpec((tile_rows, lane), lambda i: (i, 0))],
            out_specs=pl.BlockSpec((tile_rows, lane), lambda i: (i, 0)),
            input_output_aliases={0: 0},
            compiler_params=pltpu.CompilerParams(
                dimension_semantics=("parallel",)),
        )(padded)
        if row_pad:
            out = out[:rows]

    return out.reshape(orig_shape)


if __name__ == "__main__":
    key = jax.random.PRNGKey(0)
    k1, k2 = jax.random.split(key)
    # Small NCHW-style inputs standing in for the two Adj arguments.
    t1 = jax.random.normal(k1, (2, 4, 16, 16), dtype=jnp.float32)
    t2 = jax.random.normal(k2, (2, 4, 16, 16), dtype=jnp.float32)

    out = net2_forward(t1, t2)
    out = jax.block_until_ready(out)

    # forward(t1, t2) == t1 exactly.
    assert out.shape == t1.shape and out.dtype == t1.dtype
    assert bool(jnp.all(out == t1))
    print("KERNEL_OK")
</pallas_src>

<mosaic_0001>
module attributes {stable_mosaic.version = 11 : i64} {
  func.func @_copy_kernel(%arg0: i32, %arg1: memref<16x128xf32, #tpu.memory_space<vmem>>, %arg2: memref<16x128xf32, #tpu.memory_space<vmem>>) attributes {dimension_semantics = [#tpu.dimension_semantics<parallel>], iteration_bounds = array<i64: 1>, scalar_prefetch = 0 : i64, scratch_operands = 0 : i64, tpu.core_type = #tpu.core_type<tc>, window_params = [{pipeline_mode = #tpu.pipeline_mode<synchronous>, transform_indices = @transform_0, window_bounds = array<i64: 16, 128>}, {pipeline_mode = #tpu.pipeline_mode<synchronous>, transform_indices = @transform_1, window_bounds = array<i64: 16, 128>}]} {
    %c0 = arith.constant 0 : index
    %c0_0 = arith.constant 0 : index
    %0 = vector.load %arg1[%c0, %c0_0] : memref<16x128xf32, #tpu.memory_space<vmem>>, vector<16x128xf32>
    %c0_1 = arith.constant 0 : index
    %c0_2 = arith.constant 0 : index
    %1 = vector.load %arg2[%c0_1, %c0_2] : memref<16x128xf32, #tpu.memory_space<vmem>>, vector<16x128xf32>
    tpu.vector_store %arg2[%c0_1, %c0_2], %0 {strides = array<i32>} : memref<16x128xf32, #tpu.memory_space<vmem>>, vector<16x128xf32>,
    return
  }
  func.func @transform_0(%arg0: i32) -> (i32, i32) {
    %c0_i32 = arith.constant 0 : i32
    %c0_i32_0 = arith.constant 0 : i32
    %c0_i32_1 = arith.constant 0 : i32
    return %c0_i32, %c0_i32_0 : i32, i32
  }
  func.func @transform_1(%arg0: i32) -> (i32, i32) {
    %c0_i32 = arith.constant 0 : i32
    %c0_i32_0 = arith.constant 0 : i32
    %c0_i32_1 = arith.constant 0 : i32
    return %c0_i32, %c0_i32_0 : i32, i32
  }
}

</mosaic_0001>

<llo_original>
// kernel: tpu_custom_call.1
$region0: #{tpu_custom_call.1}
  #allocation0 [shape = 'u32[]', space=smem, size = 0x4, offset = 0x4, fixed_abs, tag = 'smem constant byte address 0x4 - core index']
  #allocation1 [shape = 'u32[144,128]{1,0:T(1,128)}', space=vmem, size = 0x12000, scoped, tag = 'internal scratch']
  %s0 = inlined_call_operand.hbm [shape: f32[16,128], index: 0, kind: input, shape index: {}, may-alias: {0,1}]
  %s1 = inlined_call_operand.hbm [shape: f32[16,128], index: 1, kind: output, shape index: {}, may-alias: {0,1}]
  %s2 = sld [smem:[#allocation0]]
  $region18: #{tpu_custom_call.1} parent=0
    _
  %s4 = ssub.s32 1, %s2
  %s5 = scalar_select 0, %s4, %s2
  $region1: #{tpu_custom_call.1} parent=0
    #allocation2 [shape = 'u8[8192]{0}', space=vmem, size = 0x2000, scoped, tag = 'input window, operand 0, single buffered']
    #allocation3 [shape = 's32[1]{0}', space=sflag, size = 0x4, scoped, tag = 'scoped memory for tpu_custom_call.1']
    #allocation4 [shape = 's32[1]{0}', space=sflag, size = 0x4, scoped, tag = 'scoped memory for tpu_custom_call.1']
    #allocation5 [shape = 'u8[8192]{0}', space=vmem, size = 0x2000, scoped, tag = 'output window, operand 0, single buffered']
    %6 = vsyncpa [#allocation3], 0
    %7 = vsyncpa [#allocation4], 0
    // Predicated region
    $region2: #{tpu_custom_call.1} parent=1 // pred_check
      _
    $region3: #{tpu_custom_call.1} parent=1 // pred_check_branch
      %9 = sbr.rel (0) target = $region5
    $region4: #{tpu_custom_call.1} parent=1 // pred_region
      %s11 = ssub.s32 256, 256
      %12 = vsyncadd [#allocation3], %s11
      %s13 = sshll.u32 [#allocation2], 4
      %s14 = int_to_ptr.vmem [resolvable:$true] %s13
      %19 = dma.hbm_to_vmem [thread:$0]  %s0, 256, %s14, [#allocation3], 128, 128, 8
    $region5: #{tpu_custom_call.1} parent=1 // pred_fallthru
      _
    // Predicated region
    $region6: #{tpu_custom_call.1} parent=1 // pred_check
      _
    $region7: #{tpu_custom_call.1} parent=1 // pred_check_branch
      %21 = sbr.rel (0) target = $region9
    $region8: #{tpu_custom_call.1} parent=1 // pred_region
      %22 = dma.done [#allocation3], 256
    $region9: #{tpu_custom_call.1} parent=1 // pred_fallthru
      _
    %v23 = vld [vmem:[#allocation2] sm:$0xff]
    %v24 = vld [vmem:[#allocation2 + $0x8] sm:$0xff]
    %25 = vst [vmem:[#allocation5] sm:$0xff] %v23
    %26 = vst [vmem:[#allocation5 + $0x8] sm:$0xff] %v24
    // Predicated region
    $region10: #{tpu_custom_call.1} parent=1 // pred_check
      _
    $region11: #{tpu_custom_call.1} parent=1 // pred_check_branch
      %28 = sbr.rel (0) target = $region13
    $region12: #{tpu_custom_call.1} parent=1 // pred_region
      %s30 = ssub.s32 256, 256
      %31 = vsyncadd [#allocation4], %s30
      %s32 = sshll.u32 [#allocation5], 4
      %s33 = int_to_ptr.vmem [resolvable:$true] %s32
      %38 = dma.vmem_to_hbm [thread:$0]  %s33, 256, %s1, [#allocation4], 128, 128, 8
    $region13: #{tpu_custom_call.1} parent=1 // pred_fallthru
      _
    // Predicated region
    $region14: #{tpu_custom_call.1} parent=1 // pred_check
      _
    $region15: #{tpu_custom_call.1} parent=1 // pred_check_branch
      %40 = sbr.rel (0) target = $region17
    $region16: #{tpu_custom_call.1} parent=1 // pred_region
      %41 = dma.done [#allocation4], 256
    $region17: #{tpu_custom_call.1} parent=1 // pred_fallthru
      _
    %42 = vsyncpa [#allocation3], 1
    %43 = vsyncpa [#allocation4], 1

</llo_original>
